<compile_context>
chip_gen: v7x
topology: tpu7x:2x2x1
jax: 0.10.0
libtpu: 0.0.40
codegen_flags: <defaults>
</compile_context>

<pallas_src>
import jax
import jax.numpy as jnp
from jax import lax
from jax.experimental import pallas as pl
from jax.experimental.pallas import tpu as pltpu

EPS = 1e-5


def _num_tensorcores():
    """Best-effort TensorCores-per-chip (v7x: 2, v5e/v6e: 1). Defensive: default 1."""
    try:
        info = pltpu.get_tpu_info()
        for attr in ("num_cores", "core_count", "num_tensorcores", "tensorcore_count"):
            v = getattr(info, attr, None)
            if isinstance(v, int) and v > 0:
                return v
    except Exception:
        pass
    try:
        kind = jax.devices()[0].device_kind.lower()
        if "v7" in kind or "7x" in kind:
            return 2
    except Exception:
        pass
    return 1


def _build_fused_kernel(layer_cfgs, K, pad, dil, nb, cdt):
    """Fused multi-layer BN+ReLU+Conv kernel; `nb` batch elements handled per grid step."""
    n_layers = len(layer_cfgs)

    def kernel(*refs):
        x_ref = refs[0]
        layer_refs = refs[1:1 + 2 * n_layers]     # (toeplitz_w, packed_params) per layer
        o_ref = refs[1 + 2 * n_layers]
        pad_refs = refs[2 + 2 * n_layers:]        # one vertically-padded scratch per layer

        for n in range(nb):                       # static unroll over batch-in-step
            # lane-folded activation (H, W*Cin); BN/ReLU math in f32 on the VPU (v5e-safe)
            feat = x_ref[n].astype(jnp.float32)
            for i, (H, W, Cin, Hp, Ho, Wo, Cout) in enumerate(layer_cfgs):
                tw_ref, prm_ref = layer_refs[2 * i], layer_refs[2 * i + 1]
                pad_ref = pad_refs[i]
                WC, OC = W * Cin, Wo * Cout

                # BatchNorm (folded running stats) + ReLU, lane-dense over (H, W*Cin).
                a = jnp.maximum(feat * prm_ref[0:1, :WC] + prm_ref[1:2, :WC], 0.0)

                # Only vertical padding is materialized (horizontal padding lives inside
                # the Toeplitz weight): two lane-dense pad-row memsets per grid step.
                if pad > 0 and n == 0:
                    pad_ref[:pad, :] = jnp.zeros((pad, WC), cdt)
                    pad_ref[Hp - pad:, :] = jnp.zeros((pad, WC), cdt)
                pad_ref[pad:pad + H, :] = a.astype(cdt)

                # Conv as K accumulated block-Toeplitz matmuls on the MXU:
                #   (Ho, W*Cin) x (W*Cin, Wo*Cout) -> (Ho, Wo*Cout), f32 accumulation.
                # Lane-dense operands in and out; no im2col, no relayouts.
                acc = None
                for kh in range(K):
                    part = jnp.dot(pad_ref[kh * dil:kh * dil + Ho, :], tw_ref[kh],
                                   preferred_element_type=jnp.float32)
                    acc = part if acc is None else acc + part

                # Bias add, lane-dense broadcast over the folded (Ho, Wo*Cout) view.
                feat = acc + prm_ref[2:3, :OC]

            # lane-dense store (last dim = Wo*Cout; a multiple of 128 at these shapes)
            o_ref[n] = feat.astype(o_ref.dtype)

    return kernel


def conv_block_preact_pallas(x_nchw, params, ksize, pad=True, dilation=1,
                             compute_dtype=jnp.bfloat16, batch_per_step=None):
    """ConvBlock_PreAct forward (eval mode), all layers fused into one Pallas kernel."""
    pad_size = int(ksize // 2) if pad else 0
    N, Cin0, H0, W0 = x_nchw.shape

    # Batch elements per grid step: collapse the batch on single-TC chips (v5e/v6e),
    # keep one element per step (sharded across cores) on multi-TC chips (v7x).
    if batch_per_step is None:
        batch_per_step = 1 if _num_tensorcores() > 1 else N
    nb = max(1, min(N, int(batch_per_step)))
    while N % nb != 0:
        nb -= 1
    grid = (N // nb,)

    # NCHW -> NHWC -> lane-folded (N, H, W*C); contiguous reshape. DMA in compute dtype.
    x_folded = jnp.transpose(x_nchw, (0, 2, 3, 1)).reshape(N, H0, W0 * Cin0)
    x_folded = x_folded.astype(compute_dtype)

    layer_cfgs = []
    operands = [x_folded]
    in_specs = [pl.BlockSpec((nb, H0, W0 * Cin0), lambda n: (n, 0, 0))]
    scratch_shapes = []

    H, W, Cin = H0, W0, Cin0
    for p in params:
        Cout = p["w"].shape[-1]
        Hp = H + 2 * pad_size
        Ho = Hp - dilation * (ksize - 1)
        Wo = W + 2 * pad_size - dilation * (ksize - 1)

        # Block-Toeplitz weight:
        #   T[kh, w*Cin+ci, wo*Cout+co] = w[kh, kw, ci, co]
        #     iff w == wo + kw*dilation - pad_size and 0 <= w < W
        # (horizontal padding is folded in as implicit zero rows).
        w_idx = jnp.arange(W)[:, None, None]
        wo_idx = jnp.arange(Wo)[None, :, None]
        kw_idx = jnp.arange(ksize)[None, None, :]
        tap = (w_idx == wo_idx + kw_idx * dilation - pad_size).astype(jnp.float32)
        tw = jnp.einsum("pqk,hkio->hpiqo", tap, p["w"].astype(jnp.float32))
        tw = tw.reshape(ksize, W * Cin, Wo * Cout).astype(compute_dtype)

        # Folded BN scale/shift (running stats) + conv bias, packed into ONE operand.
        scale = p["gamma"] / jnp.sqrt(p["var"] + EPS)
        shift = p["beta"] - p["mean"] * scale
        P = max(W * Cin, Wo * Cout)
        prm = jnp.zeros((3, P), jnp.float32)
        prm = prm.at[0, :W * Cin].set(jnp.tile(scale, W))
        prm = prm.at[1, :W * Cin].set(jnp.tile(shift, W))
        prm = prm.at[2, :Wo * Cout].set(jnp.tile(p["b"], Wo))

        operands += [tw, prm]
        in_specs += [
            pl.BlockSpec((ksize, W * Cin, Wo * Cout), lambda n: (0, 0, 0)),
            pl.BlockSpec((3, P), lambda n: (0, 0)),
        ]
        # Vertically padded activation scratch (interior fully rewritten every step).
        scratch_shapes.append(pltpu.VMEM((Hp, W * Cin), compute_dtype))
        layer_cfgs.append((H, W, Cin, Hp, Ho, Wo, Cout))
        H, W, Cin = Ho, Wo, Cout

    Ho_l, Wo_l, Cout_l = H, W, Cin
    kernel = _build_fused_kernel(tuple(layer_cfgs), ksize, pad_size, dilation, nb,
                                 compute_dtype)

    out_folded = pl.pallas_call(
        kernel,
        out_shape=jax.ShapeDtypeStruct((N, Ho_l, Wo_l * Cout_l), jnp.float32),
        grid_spec=pltpu.PrefetchScalarGridSpec(
            num_scalar_prefetch=0,
            grid=grid,
            in_specs=in_specs,
            out_specs=pl.BlockSpec((nb, Ho_l, Wo_l * Cout_l), lambda n: (n, 0, 0)),
            scratch_shapes=scratch_shapes,
        ),
        # VMEM footprint is well under 1 MiB here; for production shapes (esp. v7x with
        # 64 MiB physical VMEM and lane-padded scratch) re-budget blocks and set
        # vmem_limit_bytes explicitly.
        compiler_params=pltpu.CompilerParams(dimension_semantics=("parallel",)),
    )(*operands)

    out_nhwc = out_folded.reshape(N, Ho_l, Wo_l, Cout_l)
    return jnp.transpose(out_nhwc, (0, 3, 1, 2))  # NHWC -> NCHW (module interface parity)


def init_conv_block_params(key, in_ch, unit_ch, ksize):
    """Deterministic parameter init mirroring ConvBlock_PreAct.__init__ shapes."""
    if not isinstance(unit_ch, (list, tuple)):
        unit_ch = [unit_ch]
    params = []
    for out_ch in unit_ch:
        key, k1, k2, k3, k4, k5, k6 = jax.random.split(key, 7)
        layer = {
            "gamma": 1.0 + 0.1 * jax.random.normal(k1, (in_ch,), jnp.float32),
            "beta": 0.1 * jax.random.normal(k2, (in_ch,), jnp.float32),
            "mean": 0.1 * jax.random.normal(k3, (in_ch,), jnp.float32),
            "var": jnp.abs(jax.random.normal(k4, (in_ch,), jnp.float32)) + 0.5,
            "w": 0.1 * jax.random.normal(k5, (ksize, ksize, in_ch, out_ch), jnp.float32),
            "b": 0.1 * jax.random.normal(k6, (out_ch,), jnp.float32),
        }
        params.append(layer)
        in_ch = out_ch
    return params


def conv_block_preact_reference(x_nchw, params, ksize, pad=True, dilation=1):
    """Plain-JAX reference (lax.conv, highest precision) for correctness checking."""
    pad_size = int(ksize // 2) if pad else 0
    feat = jnp.transpose(x_nchw, (0, 2, 3, 1))
    for p in params:
        scale = p["gamma"] / jnp.sqrt(p["var"] + EPS)
        shift = p["beta"] - p["mean"] * scale
        act = jnp.maximum(feat * scale + shift, 0.0)
        feat = lax.conv_general_dilated(
            act, p["w"], window_strides=(1, 1),
            padding=[(pad_size, pad_size), (pad_size, pad_size)],
            rhs_dilation=(dilation, dilation),
            dimension_numbers=("NHWC", "HWIO", "NHWC"),
            precision=lax.Precision.HIGHEST,
        ) + p["b"]
    return jnp.transpose(feat, (0, 3, 1, 2))


if __name__ == "__main__":
    # ConvBlock_PreAct(in_ch=4, unit_ch=[8, 8], ksize=3, pad=True, dilation=1)
    N, IN_CH, H, W = 2, 4, 16, 16
    UNIT_CH = [8, 8]
    KSIZE = 3

    key = jax.random.PRNGKey(0)
    key, kx = jax.random.split(key)
    x = jax.random.normal(kx, (N, IN_CH, H, W), jnp.float32)  # NCHW like PyTorch

    params = init_conv_block_params(key, IN_CH, UNIT_CH, KSIZE)

    ref = jax.block_until_ready(
        conv_block_preact_reference(x, params, KSIZE, pad=True, dilation=1))

    # f32 compute path, batch sharded over grid steps (v7x-style): tight check.
    out_a = jax.block_until_ready(
        conv_block_preact_pallas(x, params, KSIZE, pad=True, dilation=1,
                                 compute_dtype=jnp.float32, batch_per_step=1))
    assert out_a.shape == (N, UNIT_CH[-1], H, W), out_a.shape
    assert jnp.allclose(out_a, ref, atol=5e-4, rtol=5e-4), (
        float(jnp.max(jnp.abs(out_a - ref))))

    # f32 compute path, whole batch collapsed into one grid step (v5e/v6e-style).
    out_b = jax.block_until_ready(
        conv_block_preact_pallas(x, params, KSIZE, pad=True, dilation=1,
                                 compute_dtype=jnp.float32, batch_per_step=N))
    assert out_b.shape == (N, UNIT_CH[-1], H, W), out_b.shape
    assert jnp.allclose(out_b, ref, atol=5e-4, rtol=5e-4), (
        float(jnp.max(jnp.abs(out_b - ref))))

    # bf16 fast path (bf16 operands / DMA, f32 accumulation), auto batch gating: loose check.
    out_bf16 = jax.block_until_ready(
        conv_block_preact_pallas(x, params, KSIZE, pad=True, dilation=1,
                                 compute_dtype=jnp.bfloat16))
    assert out_bf16.shape == (N, UNIT_CH[-1], H, W), out_bf16.shape
    assert jnp.allclose(out_bf16, ref, atol=1e-1, rtol=1e-1), (
        float(jnp.max(jnp.abs(out_bf16 - ref))))

    print("KERNEL_OK")
</pallas_src>

<mosaic_0001>
module attributes {stable_mosaic.version = 11 : i64} {
  func.func @kernel(%arg0: i32, %arg1: memref<1x16x64xf32, #tpu.memory_space<vmem>>, %arg2: memref<3x64x128xf32, #tpu.memory_space<vmem>>, %arg3: memref<3x128xf32, #tpu.memory_space<vmem>>, %arg4: memref<3x128x128xf32, #tpu.memory_space<vmem>>, %arg5: memref<3x128xf32, #tpu.memory_space<vmem>>, %arg6: memref<1x16x128xf32, #tpu.memory_space<vmem>>, %arg7: memref<18x64xf32, #tpu.memory_space<vmem>>, %arg8: memref<18x128xf32, #tpu.memory_space<vmem>>) attributes {dimension_semantics = [#tpu.dimension_semantics<parallel>], iteration_bounds = array<i64: 2>, scalar_prefetch = 0 : i64, scratch_operands = 2 : i64, tpu.core_type = #tpu.core_type<tc>, window_params = [{transform_indices = @transform_0, window_bounds = array<i64: 1, 16, 64>}, {pipeline_mode = #tpu.pipeline_mode<synchronous>, transform_indices = @transform_1, window_bounds = array<i64: 3, 64, 128>}, {pipeline_mode = #tpu.pipeline_mode<synchronous>, transform_indices = @transform_2, window_bounds = array<i64: 3, 128>}, {pipeline_mode = #tpu.pipeline_mode<synchronous>, transform_indices = @transform_3, window_bounds = array<i64: 3, 128, 128>}, {pipeline_mode = #tpu.pipeline_mode<synchronous>, transform_indices = @transform_4, window_bounds = array<i64: 3, 128>}, {transform_indices = @transform_5, window_bounds = array<i64: 1, 16, 128>}]} {
    %c0 = arith.constant 0 : index
    %c0_0 = arith.constant 0 : index
    %c0_1 = arith.constant 0 : index
    %0 = vector.load %arg1[%c0, %c0_0, %c0_1] : memref<1x16x64xf32, #tpu.memory_space<vmem>>, vector<1x16x64xf32>
    %1 = vector.shape_cast %0 : vector<1x16x64xf32> to vector<16x64xf32>
    %c0_2 = arith.constant 0 : index
    %c0_3 = arith.constant 0 : index
    %2 = vector.load %arg3[%c0_2, %c0_3] : memref<3x128xf32, #tpu.memory_space<vmem>>, vector<1x64xf32>
    %3 = vector.broadcast %2 : vector<1x64xf32> to vector<16x64xf32>
    %4 = arith.mulf %1, %3 : vector<16x64xf32>
    %c1 = arith.constant 1 : index
    %c0_4 = arith.constant 0 : index
    %5 = vector.load %arg3[%c1, %c0_4] : memref<3x128xf32, #tpu.memory_space<vmem>>, vector<1x64xf32>
    %6 = vector.broadcast %5 : vector<1x64xf32> to vector<16x64xf32>
    %7 = arith.addf %4, %6 : vector<16x64xf32>
    %cst = arith.constant 0.000000e+00 : f32
    %8 = vector.broadcast %cst : f32 to vector<16x64xf32>
    %9 = arith.maximumf %7, %8 : vector<16x64xf32>
    %cst_5 = arith.constant 0.000000e+00 : f32
    %10 = vector.broadcast %cst_5 : f32 to vector<1x64xf32>
    %c0_6 = arith.constant 0 : index
    %c0_7 = arith.constant 0 : index
    %11 = vector.load %arg7[%c0_6, %c0_7] : memref<18x64xf32, #tpu.memory_space<vmem>>, vector<1x64xf32>
    tpu.vector_store %arg7[%c0_6, %c0_7], %10 {strides = array<i32>} : memref<18x64xf32, #tpu.memory_space<vmem>>, vector<1x64xf32>,
    %cst_8 = arith.constant 0.000000e+00 : f32
    %12 = vector.broadcast %cst_8 : f32 to vector<1x64xf32>
    %c17 = arith.constant 17 : index
    %c0_9 = arith.constant 0 : index
    %13 = vector.load %arg7[%c17, %c0_9] : memref<18x64xf32, #tpu.memory_space<vmem>>, vector<1x64xf32>
    tpu.vector_store %arg7[%c17, %c0_9], %12 {strides = array<i32>} : memref<18x64xf32, #tpu.memory_space<vmem>>, vector<1x64xf32>,
    %c1_10 = arith.constant 1 : index
    %c0_11 = arith.constant 0 : index
    %14 = vector.load %arg7[%c1_10, %c0_11] : memref<18x64xf32, #tpu.memory_space<vmem>>, vector<16x64xf32>
    tpu.vector_store %arg7[%c1_10, %c0_11], %9 {strides = array<i32>} : memref<18x64xf32, #tpu.memory_space<vmem>>, vector<16x64xf32>,
    %c0_12 = arith.constant 0 : index
    %c0_13 = arith.constant 0 : index
    %15 = vector.load %arg7[%c0_12, %c0_13] : memref<18x64xf32, #tpu.memory_space<vmem>>, vector<16x64xf32>
    %c0_14 = arith.constant 0 : index
    %c0_15 = arith.constant 0 : index
    %c0_16 = arith.constant 0 : index
    %16 = vector.load %arg2[%c0_14, %c0_15, %c0_16] : memref<3x64x128xf32, #tpu.memory_space<vmem>>, vector<1x64x128xf32>
    %17 = vector.shape_cast %16 : vector<1x64x128xf32> to vector<64x128xf32>
    %cst_17 = arith.constant dense<0.000000e+00> : vector<16x128xf32>
    %18 = tpu.matmul %15, %17, %cst_17 {dimension_numbers = #tpu.dot_dimension_numbers<[1], [0], [0], [1], [0, 0, 1, 1], [], []>} : vector<16x64xf32>, vector<64x128xf32>, vector<16x128xf32> -> vector<16x128xf32>
    %c1_18 = arith.constant 1 : index
    %c0_19 = arith.constant 0 : index
    %19 = vector.load %arg7[%c1_18, %c0_19] : memref<18x64xf32, #tpu.memory_space<vmem>>, vector<16x64xf32>
    %c1_20 = arith.constant 1 : index
    %c0_21 = arith.constant 0 : index
    %c0_22 = arith.constant 0 : index
    %20 = vector.load %arg2[%c1_20, %c0_21, %c0_22] : memref<3x64x128xf32, #tpu.memory_space<vmem>>, vector<1x64x128xf32>
    %21 = vector.shape_cast %20 : vector<1x64x128xf32> to vector<64x128xf32>
    %cst_23 = arith.constant dense<0.000000e+00> : vector<16x128xf32>
    %22 = tpu.matmul %19, %21, %cst_23 {dimension_numbers = #tpu.dot_dimension_numbers<[1], [0], [0], [1], [0, 0, 1, 1], [], []>} : vector<16x64xf32>, vector<64x128xf32>, vector<16x128xf32> -> vector<16x128xf32>
    %23 = arith.addf %18, %22 : vector<16x128xf32>
    %c2 = arith.constant 2 : index
    %c0_24 = arith.constant 0 : index
    %24 = vector.load %arg7[%c2, %c0_24] : memref<18x64xf32, #tpu.memory_space<vmem>>, vector<16x64xf32>
    %c2_25 = arith.constant 2 : index
    %c0_26 = arith.constant 0 : index
    %c0_27 = arith.constant 0 : index
    %25 = vector.load %arg2[%c2_25, %c0_26, %c0_27] : memref<3x64x128xf32, #tpu.memory_space<vmem>>, vector<1x64x128xf32>
    %26 = vector.shape_cast %25 : vector<1x64x128xf32> to vector<64x128xf32>
    %cst_28 = arith.constant dense<0.000000e+00> : vector<16x128xf32>
    %27 = tpu.matmul %24, %26, %cst_28 {dimension_numbers = #tpu.dot_dimension_numbers<[1], [0], [0], [1], [0, 0, 1, 1], [], []>} : vector<16x64xf32>, vector<64x128xf32>, vector<16x128xf32> -> vector<16x128xf32>
    %28 = arith.addf %23, %27 : vector<16x128xf32>
    %c2_29 = arith.constant 2 : index
    %c0_30 = arith.constant 0 : index
    %29 = vector.load %arg3[%c2_29, %c0_30] : memref<3x128xf32, #tpu.memory_space<vmem>>, vector<1x128xf32>
    %30 = vector.broadcast %29 : vector<1x128xf32> to vector<16x128xf32>
    %31 = arith.addf %28, %30 : vector<16x128xf32>
    %c0_31 = arith.constant 0 : index
    %c0_32 = arith.constant 0 : index
    %32 = vector.load %arg5[%c0_31, %c0_32] : memref<3x128xf32, #tpu.memory_space<vmem>>, vector<1x128xf32>
    %33 = vector.broadcast %32 : vector<1x128xf32> to vector<16x128xf32>
    %34 = arith.mulf %31, %33 : vector<16x128xf32>
    %c1_33 = arith.constant 1 : index
    %c0_34 = arith.constant 0 : index
    %35 = vector.load %arg5[%c1_33, %c0_34] : memref<3x128xf32, #tpu.memory_space<vmem>>, vector<1x128xf32>
    %36 = vector.broadcast %35 : vector<1x128xf32> to vector<16x128xf32>
    %37 = arith.addf %34, %36 : vector<16x128xf32>
    %cst_35 = arith.constant 0.000000e+00 : f32
    %38 = vector.broadcast %cst_35 : f32 to vector<16x128xf32>
    %39 = arith.maximumf %37, %38 : vector<16x128xf32>
    %cst_36 = arith.constant 0.000000e+00 : f32
    %40 = vector.broadcast %cst_36 : f32 to vector<1x128xf32>
    %c0_37 = arith.constant 0 : index
    %c0_38 = arith.constant 0 : index
    %41 = vector.load %arg8[%c0_37, %c0_38] : memref<18x128xf32, #tpu.memory_space<vmem>>, vector<1x128xf32>
    tpu.vector_store %arg8[%c0_37, %c0_38], %40 {strides = array<i32>} : memref<18x128xf32, #tpu.memory_space<vmem>>, vector<1x128xf32>,
    %cst_39 = arith.constant 0.000000e+00 : f32
    %42 = vector.broadcast %cst_39 : f32 to vector<1x128xf32>
    %c17_40 = arith.constant 17 : index
    %c0_41 = arith.constant 0 : index
    %43 = vector.load %arg8[%c17_40, %c0_41] : memref<18x128xf32, #tpu.memory_space<vmem>>, vector<1x128xf32>
    tpu.vector_store %arg8[%c17_40, %c0_41], %42 {strides = array<i32>} : memref<18x128xf32, #tpu.memory_space<vmem>>, vector<1x128xf32>,
    %c1_42 = arith.constant 1 : index
    %c0_43 = arith.constant 0 : index
    %44 = vector.load %arg8[%c1_42, %c0_43] : memref<18x128xf32, #tpu.memory_space<vmem>>, vector<16x128xf32>
    tpu.vector_store %arg8[%c1_42, %c0_43], %39 {strides = array<i32>} : memref<18x128xf32, #tpu.memory_space<vmem>>, vector<16x128xf32>,
    %c0_44 = arith.constant 0 : index
    %c0_45 = arith.constant 0 : index
    %45 = vector.load %arg8[%c0_44, %c0_45] : memref<18x128xf32, #tpu.memory_space<vmem>>, vector<16x128xf32>
    %c0_46 = arith.constant 0 : index
    %c0_47 = arith.constant 0 : index
    %c0_48 = arith.constant 0 : index
    %46 = vector.load %arg4[%c0_46, %c0_47, %c0_48] : memref<3x128x128xf32, #tpu.memory_space<vmem>>, vector<1x128x128xf32>
    %47 = vector.shape_cast %46 : vector<1x128x128xf32> to vector<128x128xf32>
    %cst_49 = arith.constant dense<0.000000e+00> : vector<16x128xf32>
    %48 = tpu.matmul %45, %47, %cst_49 {dimension_numbers = #tpu.dot_dimension_numbers<[1], [0], [0], [1], [0, 0, 1, 1], [], []>} : vector<16x128xf32>, vector<128x128xf32>, vector<16x128xf32> -> vector<16x128xf32>
    %c1_50 = arith.constant 1 : index
    %c0_51 = arith.constant 0 : index
    %49 = vector.load %arg8[%c1_50, %c0_51] : memref<18x128xf32, #tpu.memory_space<vmem>>, vector<16x128xf32>
    %c1_52 = arith.constant 1 : index
    %c0_53 = arith.constant 0 : index
    %c0_54 = arith.constant 0 : index
    %50 = vector.load %arg4[%c1_52, %c0_53, %c0_54] : memref<3x128x128xf32, #tpu.memory_space<vmem>>, vector<1x128x128xf32>
    %51 = vector.shape_cast %50 : vector<1x128x128xf32> to vector<128x128xf32>
    %cst_55 = arith.constant dense<0.000000e+00> : vector<16x128xf32>
    %52 = tpu.matmul %49, %51, %cst_55 {dimension_numbers = #tpu.dot_dimension_numbers<[1], [0], [0], [1], [0, 0, 1, 1], [], []>} : vector<16x128xf32>, vector<128x128xf32>, vector<16x128xf32> -> vector<16x128xf32>
    %53 = arith.addf %48, %52 : vector<16x128xf32>
    %c2_56 = arith.constant 2 : index
    %c0_57 = arith.constant 0 : index
    %54 = vector.load %arg8[%c2_56, %c0_57] : memref<18x128xf32, #tpu.memory_space<vmem>>, vector<16x128xf32>
    %c2_58 = arith.constant 2 : index
    %c0_59 = arith.constant 0 : index
    %c0_60 = arith.constant 0 : index
    %55 = vector.load %arg4[%c2_58, %c0_59, %c0_60] : memref<3x128x128xf32, #tpu.memory_space<vmem>>, vector<1x128x128xf32>
    %56 = vector.shape_cast %55 : vector<1x128x128xf32> to vector<128x128xf32>
    %cst_61 = arith.constant dense<0.000000e+00> : vector<16x128xf32>
    %57 = tpu.matmul %54, %56, %cst_61 {dimension_numbers = #tpu.dot_dimension_numbers<[1], [0], [0], [1], [0, 0, 1, 1], [], []>} : vector<16x128xf32>, vector<128x128xf32>, vector<16x128xf32> -> vector<16x128xf32>
    %58 = arith.addf %53, %57 : vector<16x128xf32>
    %c2_62 = arith.constant 2 : index
    %c0_63 = arith.constant 0 : index
    %59 = vector.load %arg5[%c2_62, %c0_63] : memref<3x128xf32, #tpu.memory_space<vmem>>, vector<1x128xf32>
    %60 = vector.broadcast %59 : vector<1x128xf32> to vector<16x128xf32>
    %61 = arith.addf %58, %60 : vector<16x128xf32>
    %c0_64 = arith.constant 0 : index
    %c0_65 = arith.constant 0 : index
    %c0_66 = arith.constant 0 : index
    %62 = vector.load %arg6[%c0_64, %c0_65, %c0_66] : memref<1x16x128xf32, #tpu.memory_space<vmem>>, vector<1x16x128xf32>
    %63 = vector.shape_cast %62 : vector<1x16x128xf32> to vector<16x128xf32>
    %64 = vector.shape_cast %61 : vector<16x128xf32> to vector<1x16x128xf32>
    tpu.vector_store %arg6[%c0_64, %c0_65, %c0_66], %64 {strides = array<i32>} : memref<1x16x128xf32, #tpu.memory_space<vmem>>, vector<1x16x128xf32>,
    return
  }
  func.func @transform_0(%arg0: i32) -> (i32, i32, i32) {
    %c0_i32 = arith.constant 0 : i32
    %c0_i32_0 = arith.constant 0 : i32
    %c0_i32_1 = arith.constant 0 : i32
    return %arg0, %c0_i32, %c0_i32_0 : i32, i32, i32
  }
  func.func @transform_1(%arg0: i32) -> (i32, i32, i32) {
    %c0_i32 = arith.constant 0 : i32
    %c0_i32_0 = arith.constant 0 : i32
    %c0_i32_1 = arith.constant 0 : i32
    %c0_i32_2 = arith.constant 0 : i32
    return %c0_i32, %c0_i32_0, %c0_i32_1 : i32, i32, i32
  }
  func.func @transform_2(%arg0: i32) -> (i32, i32) {
    %c0_i32 = arith.constant 0 : i32
    %c0_i32_0 = arith.constant 0 : i32
    %c0_i32_1 = arith.constant 0 : i32
    return %c0_i32, %c0_i32_0 : i32, i32
  }
  func.func @transform_3(%arg0: i32) -> (i32, i32, i32) {
    %c0_i32 = arith.constant 0 : i32
    %c0_i32_0 = arith.constant 0 : i32
    %c0_i32_1 = arith.constant 0 : i32
    %c0_i32_2 = arith.constant 0 : i32
    return %c0_i32, %c0_i32_0, %c0_i32_1 : i32, i32, i32
  }
  func.func @transform_4(%arg0: i32) -> (i32, i32) {
    %c0_i32 = arith.constant 0 : i32
    %c0_i32_0 = arith.constant 0 : i32
    %c0_i32_1 = arith.constant 0 : i32
    return %c0_i32, %c0_i32_0 : i32, i32
  }
  func.func @transform_5(%arg0: i32) -> (i32, i32, i32) {
    %c0_i32 = arith.constant 0 : i32
    %c0_i32_0 = arith.constant 0 : i32
    %c0_i32_1 = arith.constant 0 : i32
    return %arg0, %c0_i32, %c0_i32_0 : i32, i32, i32
  }
}

</mosaic_0001>

<llo_original>
// kernel: tpu_custom_call.1
$region0: #{tpu_custom_call.1}
  #allocation0 [shape = 'u32[]', space=smem, size = 0x4, offset = 0x4, fixed_abs, tag = 'smem constant byte address 0x4 - core index']
  #allocation1 [shape = 'u32[144,128]{1,0:T(1,128)}', space=vmem, size = 0x12000, scoped, tag = 'internal scratch']
  #allocation2 [shape = 'f32[18,64]{1,0:T(8,128)}', space=vmem, size = 0x3000, scoped, tag = 'scratch operand']
  #allocation3 [shape = 'f32[18,128]{1,0:T(8,128)}', space=vmem, size = 0x3000, scoped, tag = 'scratch operand']
  %s0 = inlined_call_operand.hbm [shape: f32[2,16,64], index: 0, kind: input, shape index: {}]
  %s1 = inlined_call_operand.hbm [shape: f32[3,64,128], index: 1, kind: input, shape index: {}]
  %s2 = inlined_call_operand.vmem [shape: f32[3,128], index: 2, kind: input, shape index: {}]
  %s3 = inlined_call_operand.hbm [shape: f32[3,128,128], index: 3, kind: input, shape index: {}]
  %s4 = inlined_call_operand.vmem [shape: f32[3,128], index: 4, kind: input, shape index: {}]
  %s5 = inlined_call_operand.hbm [shape: f32[2,16,128], index: 5, kind: output, shape index: {}]
  %s6 = sld [smem:[#allocation0]]
  $region65: #{tpu_custom_call.1} parent=0
    _
  %s8 = ssub.s32 1, %s6
  %s9 = scalar_select 0, %s8, %s6
  $region1: #{tpu_custom_call.1} parent=0
    #allocation4 [shape = 'u8[16384]{0}', space=vmem, size = 0x4000, scoped, tag = 'input window, operand 0']
    #allocation5 [shape = 's32[2]{0}', space=sflag, size = 0x8, scoped, tag = 'scoped memory for tpu_custom_call.1']
    #allocation6 [shape = 's32[2]{0}', space=sflag, size = 0x8, scoped, tag = 'scoped memory for tpu_custom_call.1']
    #allocation7 [shape = 'u8[98304]{0}', space=vmem, size = 0x18000, scoped, tag = 'input window, operand 1, single buffered']
    #allocation8 [shape = 's32[1]{0}', space=sflag, size = 0x4, scoped, tag = 'scoped memory for tpu_custom_call.1']
    #allocation9 [shape = 'u8[196608]{0}', space=vmem, size = 0x30000, scoped, tag = 'input window, operand 3, single buffered']
    #allocation10 [shape = 'u8[16384]{0}', space=vmem, size = 0x4000, scoped, tag = 'output window, operand 0']
    %10 = vsyncpa [#allocation5], 0
    %s11 = scalar_lea.sflag [#allocation5], 1
    %12 = vsyncpa %s11, 0
    %13 = vsyncpa [#allocation8], 0
    %14 = vsyncpa [#allocation6], 0
    %s15 = scalar_lea.sflag [#allocation6], 1
    %16 = vsyncpa %s15, 0
    loop: start=0, step=1, limit=4
    $region2: #{tpu_custom_call.1} parent=1 // loop_pre_header
      _
    $region3: #{tpu_custom_call.1} parent=1 // loop_header
      %s18 = sphi 0, %s22
      %p19 = scmp.ge.s32.totalorder %s18, 4
      %s28 = sphi 0, %s30
      %s31 = sphi 0, %s28
      %s32 = sphi 0, %s31
      %s48 = sphi 0, %s32
      %s52 = sphi 0, %s52
      %s54 = sphi 0, %s52
      %s55 = sphi 0, %s54
      %s69 = sphi 0, %s55
      %s73 = sphi 0, %s73
      %s75 = sphi 0, %s73
      %s76 = sphi 0, %s75
      %s90 = sphi 0, %s76
      %s94 = sphi 0, %s94
      %s96 = sphi 0, %s94
      %s97 = sphi 0, %s96
      %s111 = sphi 0, %s97
      %s115 = sphi 0, %s115
      %s117 = sphi 0, %s115
      %s118 = sphi 0, %s117
      %s132 = sphi 0, %s118
      %s138 = sphi 0, %s140
      %s141 = sphi 0, %s138
      %s142 = sphi 0, %s141
      %s158 = sphi 0, %s142
    $region4: #{tpu_custom_call.1} parent=1 // loop_header_branch
      %21 = sbr.rel (%p19) target = $region8
    $region5: #{tpu_custom_call.1} parent=1 // loop_body
      %s23 = ssub.s32 %s18, 1
      %s24 = ssub.s32 %s18, 2
      %s25 = sadd.s32 %s18, 1
      %s26 = ssub.s32 %s18, %s25
      %p27 = scmp.eq.s32.totalorder %s26, 0
      %s29 = sadd.s32 %s28, 1
      %s30 = scalar_select %p27, %s28, %s29
      %p33 = pneg %p27
      %p34 = scmp.eq.s32.totalorder %s18, 1
      %p35 = por %p33, %p34
      %p36 = scmp.ne.s32.totalorder %s28, %s31
      %p37 = scmp.eq.s32.totalorder %s18, 0
      %p38 = por %p36, %p37
      %p39 = scmp.ne.s32.totalorder %s28, %s31
      %p40 = scmp.eq.s32.totalorder %s23, 1
      %p41 = por %p39, %p40
      %p42 = scmp.ne.s32.totalorder %s31, %s32
      %p43 = scmp.eq.s32.totalorder %s23, 0
      %p44 = por %p42, %p43
      %p45 = scmp.ne.s32.totalorder %s31, %s32
      %p46 = scmp.eq.s32.totalorder %s24, 1
      %p47 = por %p45, %p46
      %p49 = scmp.ne.s32.totalorder %s32, %s48
      %p50 = scmp.eq.s32.totalorder %s24, 0
      %p51 = por %p49, %p50
      %s53 = sadd.s32 %s52, 1
      %p56 = scmp.eq.s32.totalorder %s18, 1
      %p57 = scmp.ne.s32.totalorder %s52, %s54
      %p58 = scmp.eq.s32.totalorder %s18, 0
      %p59 = por %p57, %p58
      %p60 = scmp.ne.s32.totalorder %s52, %s54
      %p61 = scmp.eq.s32.totalorder %s23, 1
      %p62 = por %p60, %p61
      %p63 = scmp.ne.s32.totalorder %s54, %s55
      %p64 = scmp.eq.s32.totalorder %s23, 0
      %p65 = por %p63, %p64
      %p66 = scmp.ne.s32.totalorder %s54, %s55
      %p67 = scmp.eq.s32.totalorder %s24, 1
      %p68 = por %p66, %p67
      %p70 = scmp.ne.s32.totalorder %s55, %s69
      %p71 = scmp.eq.s32.totalorder %s24, 0
      %p72 = por %p70, %p71
      %s74 = sadd.s32 %s73, 1
      %p77 = scmp.eq.s32.totalorder %s18, 1
      %p78 = scmp.ne.s32.totalorder %s73, %s75
      %p79 = scmp.eq.s32.totalorder %s18, 0
      %p80 = por %p78, %p79
      %p81 = scmp.ne.s32.totalorder %s73, %s75
      %p82 = scmp.eq.s32.totalorder %s23, 1
      %p83 = por %p81, %p82
      %p84 = scmp.ne.s32.totalorder %s75, %s76
      %p85 = scmp.eq.s32.totalorder %s23, 0
      %p86 = por %p84, %p85
      %p87 = scmp.ne.s32.totalorder %s75, %s76
      %p88 = scmp.eq.s32.totalorder %s24, 1
      %p89 = por %p87, %p88
      %p91 = scmp.ne.s32.totalorder %s76, %s90
      %p92 = scmp.eq.s32.totalorder %s24, 0
      %p93 = por %p91, %p92
      %s95 = sadd.s32 %s94, 1
      %p98 = scmp.eq.s32.totalorder %s18, 1
      %p99 = scmp.ne.s32.totalorder %s94, %s96
      %p100 = scmp.eq.s32.totalorder %s18, 0
      %p101 = por %p99, %p100
      %p102 = scmp.ne.s32.totalorder %s94, %s96
      %p103 = scmp.eq.s32.totalorder %s23, 1
      %p104 = por %p102, %p103
      %p105 = scmp.ne.s32.totalorder %s96, %s97
      %p106 = scmp.eq.s32.totalorder %s23, 0
      %p107 = por %p105, %p106
      %p108 = scmp.ne.s32.totalorder %s96, %s97
      %p109 = scmp.eq.s32.totalorder %s24, 1
      %p110 = por %p108, %p109
      %p112 = scmp.ne.s32.totalorder %s97, %s111
      %p113 = scmp.eq.s32.totalorder %s24, 0
      %p114 = por %p112, %p113
      %s116 = sadd.s32 %s115, 1
      %p119 = scmp.eq.s32.totalorder %s18, 1
      %p120 = scmp.ne.s32.totalorder %s115, %s117
      %p121 = scmp.eq.s32.totalorder %s18, 0
      %p122 = por %p120, %p121
      %p123 = scmp.ne.s32.totalorder %s115, %s117
      %p124 = scmp.eq.s32.totalorder %s23, 1
      %p125 = por %p123, %p124
      %p126 = scmp.ne.s32.totalorder %s117, %s118
      %p127 = scmp.eq.s32.totalorder %s23, 0
      %p128 = por %p126, %p127
      %p129 = scmp.ne.s32.totalorder %s117, %s118
      %p130 = scmp.eq.s32.totalorder %s24, 1
      %p131 = por %p129, %p130
      %p133 = scmp.ne.s32.totalorder %s118, %s132
      %p134 = scmp.eq.s32.totalorder %s24, 0
      %p135 = por %p133, %p134
      %s136 = ssub.s32 %s18, %s25
      %p137 = scmp.eq.s32.totalorder %s136, 0
      %s139 = sadd.s32 %s138, 1
      %s140 = scalar_select %p137, %s138, %s139
      %p143 = pneg %p137
      %p144 = scmp.eq.s32.totalorder %s18, 1
      %p145 = por %p143, %p144
      %p146 = scmp.ne.s32.totalorder %s138, %s141
      %p147 = scmp.eq.s32.totalorder %s18, 0
      %p148 = por %p146, %p147
      %p149 = scmp.ne.s32.totalorder %s138, %s141
      %p150 = scmp.eq.s32.totalorder %s23, 1
      %p151 = por %p149, %p150
      %p152 = scmp.ne.s32.totalorder %s141, %s142
      %p153 = scmp.eq.s32.totalorder %s23, 0
      %p154 = por %p152, %p153
      %p155 = scmp.ne.s32.totalorder %s141, %s142
      %p156 = scmp.eq.s32.totalorder %s24, 1
      %p157 = por %p155, %p156
      %p159 = scmp.ne.s32.totalorder %s142, %s158
      %p160 = scmp.eq.s32.totalorder %s24, 0
      %p161 = por %p159, %p160
      %p162 = scmp.le.s32.totalorder 1, %s18
      %p163 = scmp.lt.s32.totalorder %s18, 3
      %p164 = pnand %p162, %p163
      %p165 = pneg %p164
      // Predicated region
      $region9: #{tpu_custom_call.1} parent=5 // pred_check
        _
      $region10: #{tpu_custom_call.1} parent=5 // pred_check_branch
        %167 = sbr.rel (%p164) target = $region12
      $region11: #{tpu_custom_call.1} parent=5 // pred_region
        %s168 = ssub.s32 %s18, 1
        // Predicated region
        $region13: #{tpu_custom_call.1} parent=11 // pred_check
          %p169 = pneg %p65
        $region14: #{tpu_custom_call.1} parent=11 // pred_check_branch
          %171 = sbr.rel (%p169) target = $region16
        $region15: #{tpu_custom_call.1} parent=11 // pred_region
          %s173 = ssub.s32 3072, 3072
          %174 = vsyncadd [#allocation8], %s173
          %s175 = sshll.u32 [#allocation7], 4
          %s176 = int_to_ptr.vmem [resolvable:$true] %s175
          %181 = dma.hbm_to_vmem [thread:$0]  %s1, 3072, %s176, [#allocation8], 128, 128, 8
        $region16: #{tpu_custom_call.1} parent=11 // pred_fallthru
          _
        // Predicated region
        $region17: #{tpu_custom_call.1} parent=11 // pred_check
          %p182 = pneg %p86
        $region18: #{tpu_custom_call.1} parent=11 // pred_check_branch
          %184 = sbr.rel (%p182) target = $region20
        $region19: #{tpu_custom_call.1} parent=11 // pred_region
          _
        $region20: #{tpu_custom_call.1} parent=11 // pred_fallthru
          _
        // Predicated region
        $region21: #{tpu_custom_call.1} parent=11 // pred_check
          %p185 = pneg %p107
        $region22: #{tpu_custom_call.1} parent=11 // pred_check_branch
          %187 = sbr.rel (%p185) target = $region24
        $region23: #{tpu_custom_call.1} parent=11 // pred_region
          %s189 = ssub.s32 6144, 6144
          %190 = vsyncadd [#allocation8], %s189
          %s191 = sshll.u32 [#allocation9], 4
          %s192 = int_to_ptr.vmem [resolvable:$true] %s191
          %197 = dma.hbm_to_vmem [thread:$0]  %s3, 6144, %s192, [#allocation8], 128, 128, 8
        $region24: #{tpu_custom_call.1} parent=11 // pred_fallthru
          _
        // Predicated region
        $region25: #{tpu_custom_call.1} parent=11 // pred_check
          %p198 = pneg %p128
        $region26: #{tpu_custom_call.1} parent=11 // pred_check_branch
          %200 = sbr.rel (%p198) target = $region28
        $region27: #{tpu_custom_call.1} parent=11 // pred_region
          _
        $region28: #{tpu_custom_call.1} parent=11 // pred_fallthru
          _
      $region12: #{tpu_custom_call.1} parent=5 // pred_fallthru
        _
      %p201 = scmp.lt.s32.totalorder %s18, 2
      // Predicated region
      $region29: #{tpu_custom_call.1} parent=5 // pred_check
        %p202 = pneg %p201
      $region30: #{tpu_custom_call.1} parent=5 // pred_check_branch
        %204 = sbr.rel (%p202) target = $region32
      $region31: #{tpu_custom_call.1} parent=5 // pred_region
        // Predicated region
        $region33: #{tpu_custom_call.1} parent=31 // pred_check
          %p205 = pneg %p38
        $region34: #{tpu_custom_call.1} parent=31 // pred_check_branch
          %207 = sbr.rel (%p205) target = $region36
        $region35: #{tpu_custom_call.1} parent=31 // pred_region
          %s208 = sand.u32 %s28, 1
          %s209 = scalar_lea.sflag [#allocation5], %s208
          %s210 = sand.u32 %s28, 1
          %s211 = smul.addr %s210, 16
          %s212 = scalar_lea.vmem [#allocation4], %s211
          %s214 = ssub.s32 256, 256
          %215 = vsyncadd %s209, %s214
          %s216 = smul.addr %s18, 2
          %s217 = smul.addr %s216, 128
          %s218 = scalar_lea.hbm %s0, %s217
          %s219 = sshll.u32 %s212, 4
          %s220 = int_to_ptr.vmem [resolvable:$true] %s219
          %225 = dma.hbm_to_vmem [thread:$0]  %s218, 256, %s220, %s209, 128, 128, 8
        $region36: #{tpu_custom_call.1} parent=31 // pred_fallthru
          _
      $region32: #{tpu_custom_call.1} parent=5 // pred_fallthru
        _
      %p226 = scmp.le.s32.totalorder 1, %s18
      %p227 = scmp.lt.s32.totalorder %s18, 3
      %p228 = pnand %p226, %p227
      %p229 = pneg %p228
      // Predicated region
      $region37: #{tpu_custom_call.1} parent=5 // pred_check
        _
      $region38: #{tpu_custom_call.1} parent=5 // pred_check_branch
        %231 = sbr.rel (%p228) target = $region40
      $region39: #{tpu_custom_call.1} parent=5 // pred_region
        %s232 = ssub.s32 %s18, 1
        %s233 = sand.u32 %s31, 1
        %s234 = scalar_lea.sflag [#allocation5], %s233
        %s235 = sand.u32 %s31, 1
        %s236 = smul.addr %s235, 16
        %s237 = scalar_lea.vmem [#allocation4], %s236
        // Predicated region
        $region41: #{tpu_custom_call.1} parent=39 // pred_check
          %p238 = pneg %p44
        $region42: #{tpu_custom_call.1} parent=39 // pred_check_branch
          %240 = sbr.rel (%p238) target = $region44
        $region43: #{tpu_custom_call.1} parent=39 // pred_region
          %241 = dma.done %s234, 256
        $region44: #{tpu_custom_call.1} parent=39 // pred_fallthru
          _
        // Predicated region
        $region45: #{tpu_custom_call.1} parent=39 // pred_check
          %p242 = pneg %p65
        $region46: #{tpu_custom_call.1} parent=39 // pred_check_branch
          %244 = sbr.rel (%p242) target = $region48
        $region47: #{tpu_custom_call.1} parent=39 // pred_region
          %245 = dma.done [#allocation8], 3072
        $region48: #{tpu_custom_call.1} parent=39 // pred_fallthru
          _
        // Predicated region
        $region49: #{tpu_custom_call.1} parent=39 // pred_check
          %p246 = pneg %p107
        $region50: #{tpu_custom_call.1} parent=39 // pred_check_branch
          %248 = sbr.rel (%p246) target = $region52
        $region51: #{tpu_custom_call.1} parent=39 // pred_region
          %249 = dma.done [#allocation8], 6144
        $region52: #{tpu_custom_call.1} parent=39 // pred_fallthru
          _
        %s250 = sand.u32 %s31, 1
        %s251 = scalar_lea.sflag [#allocation5], %s250
        %s252 = sand.u32 %s31, 1
        %s253 = smul.addr %s252, 16
        %s254 = scalar_lea.vmem [#allocation4], %s253
        %p255 = pneg %p44
        %p256 = pneg %p41
        %p257 = pneg %p65
        %p258 = pneg %p62
        %p259 = pneg %p86
        %p260 = pneg %p83
        %p261 = pneg %p107
        %p262 = pneg %p104
        %p263 = pneg %p128
        %p264 = pneg %p125
        %p265 = pneg %p154
        %p266 = pneg %p151
        %s267 = sand.u32 %s141, 1
        %s268 = scalar_lea.sflag [#allocation6], %s267
        %s269 = sand.u32 %s141, 1
        %s270 = smul.addr %s269, 16
        %s271 = scalar_lea.vmem [#allocation10], %s270
        %v272 = vld [vmem:[%s237] sm:$0xff]
        %v273 = vld [vmem:[%s237 + $0x8] sm:$0xff]
        %v274 = vld [vmem:[%s2] sm:$0x1]
        %v275 = vlaneseq
        %v276 = vshrl.u32 %v275, 7
        %v277 = vsub.s32 0, %v276
        %v278 = vrot.slane %v274, %v277
        %v279 = vmul.f32 %v272, %v278
        %v280 = vmul.f32 %v273, %v278
        %v281 = vld [vmem:[%s2 + $0x1] sm:$0x1]
        %v282 = vlaneseq
        %v283 = vshrl.u32 %v282, 7
        %v284 = vsub.s32 0, %v283
        %v285 = vrot.slane %v281, %v284
        %v286 = vadd.f32 %v279, %v285
        %v287 = vadd.f32 %v280, %v285
        %v288 = vmax.f32 %v286, 0.0
        %v289 = vmax.f32 %v287, 0.0
        %vm290 = vcmask 516096
        %291 = vst.msk [vmem:[#allocation2] sm:$0x1] %vm290, 0.0
        %292 = vst.msk [vmem:[#allocation2 + $0x11] sm:$0x1] %vm290, 0.0
        %vm293 = vcmask 523264
        %294 = vst.msk [vmem:[#allocation2 + $0x1] sm:$0xff] %vm293, %v288
        %295 = vst.msk [vmem:[#allocation2 + $0x9] sm:$0xff] %vm293, %v289
        %v296 = vld [vmem:[#allocation2] sm:$0xff]
        %v297 = vld [vmem:[#allocation2 + $0x8] sm:$0xff]
        %v298 = vld [vmem:[#allocation7] sm:$0xff]
        %v299 = vld [vmem:[#allocation7 + $0x8] sm:$0xff]
        %v300 = vld [vmem:[#allocation7 + $0x10] sm:$0xff]
        %v301 = vld [vmem:[#allocation7 + $0x18] sm:$0xff]
        %v302 = vld [vmem:[#allocation7 + $0x20] sm:$0xff]
        %v303 = vld [vmem:[#allocation7 + $0x28] sm:$0xff]
        %v304 = vld [vmem:[#allocation7 + $0x30] sm:$0xff]
        %v305 = vld [vmem:[#allocation7 + $0x38] sm:$0xff]
        %v306 = vld [vmem:[#allocation2 + $0x1] sm:$0xff]
        %v307 = vld [vmem:[#allocation2 + $0x9] sm:$0xff]
        %s308 = scalar_lea.vmem [#allocation7], 64
        %v309 = vld [vmem:[%s308] sm:$0xff]
        %v310 = vld [vmem:[%s308 + $0x8] sm:$0xff]
        %v311 = vld [vmem:[%s308 + $0x10] sm:$0xff]
        %v312 = vld [vmem:[%s308 + $0x18] sm:$0xff]
        %v313 = vld [vmem:[%s308 + $0x20] sm:$0xff]
        %v314 = vld [vmem:[%s308 + $0x28] sm:$0xff]
        %v315 = vld [vmem:[%s308 + $0x30] sm:$0xff]
        %v316 = vld [vmem:[%s308 + $0x38] sm:$0xff]
        %v318 = vsel %vm293, %v306, 0
        %v321 = vsel %vm293, %v307, 0
        %323 = vmatprep.subr.mxu0 0.0
        %324 = vmatpush1.msra.mxu0 %v309
        %325 = vmatprep.subr.mxu0 0.0
        %326 = vmatpush1.msra.mxu0 %v310
        %327 = vmatprep.subr.mxu0 0.0
        %328 = vmatpush1.msra.mxu0 %v311
        %329 = vmatprep.subr.mxu0 0.0
        %330 = vmatpush1.msra.mxu0 %v312
        %331 = vmatprep.subr.mxu0 0.0
        %332 = vmatpush1.msra.mxu0 %v313
        %333 = vmatprep.subr.mxu0 0.0
        %334 = vmatpush1.msra.mxu0 %v314
        %335 = vmatprep.subr.mxu0 0.0
        %336 = vmatpush1.msra.mxu0 %v315
        %337 = vmatprep.subr.mxu0 0.0
        %338 = vmatpush1.msra.mxu0 %v316
        %339 = vmatprep.subr.mxu0 0.0
        %340 = vmatpush1.msra.mxu0 0.0
        %341 = vmatprep.subr.mxu0 0.0
        %342 = vmatpush1.msra.mxu0 0.0
        %343 = vmatprep.subr.mxu0 0.0
        %344 = vmatpush1.msra.mxu0 0.0
        %345 = vmatprep.subr.mxu0 0.0
        %346 = vmatpush1.msra.mxu0 0.0
        %347 = vmatprep.subr.mxu0 0.0
        %348 = vmatpush1.msra.mxu0 0.0
        %349 = vmatprep.subr.mxu0 0.0
        %350 = vmatpush1.msra.mxu0 0.0
        %351 = vmatprep.subr.mxu0 0.0
        %352 = vmatpush1.msra.mxu0 0.0
        %353 = vmatprep.subr.mxu0 0.0
        %354 = vmatpush1.msra.mxu0 0.0
        %355 = vmatprep.subr.mxu0 0.0
        %356 = vmatpush1.msra.mxu0 0.0
        %357 = vmatprep.subr.mxu0 0.0
        %358 = vmatpush1.msra.mxu0 0.0
        %359 = vmatprep.subr.mxu0 0.0
        %360 = vmatpush1.msra.mxu0 0.0
        %361 = vmatprep.subr.mxu0 0.0
        %362 = vmatpush1.msra.mxu0 0.0
        %363 = vmatprep.subr.mxu0 0.0
        %364 = vmatpush1.msra.mxu0 0.0
        %365 = vmatprep.subr.mxu0 0.0
        %366 = vmatpush1.msra.mxu0 0.0
        %367 = vmatprep.subr.mxu0 0.0
        %368 = vmatpush1.msra.mxu0 0.0
        %369 = vmatprep.subr.mxu0 0.0
        %370 = vmatpush1.msra.mxu0 0.0
        %371 = vmatprep.subr.mxu0 0.0
        %372 = vmatpush1.msra.mxu0 0.0
        %373 = vmatprep.subr.mxu0 0.0
        %374 = vmatpush1.msra.mxu0 0.0
        %375 = vmatprep.subr.mxu0 0.0
        %376 = vmatpush1.msra.mxu0 0.0
        %377 = vmatprep.subr.mxu0 0.0
        %378 = vmatpush1.msra.mxu0 0.0
        %379 = vmatprep.subr.mxu0 0.0
        %380 = vmatpush1.msra.mxu0 0.0
        %381 = vmatprep.subr.mxu0 0.0
        %382 = vmatpush1.msra.mxu0 0.0
        %383 = vmatprep.subr.mxu0 0.0
        %384 = vmatpush1.msra.mxu0 0.0
        %385 = vmatprep.subr.mxu0 0.0
        %386 = vmatpush1.msra.mxu0 0.0
        %387 = vmatprep.mubr.f32.mxu0 0.0
        %388 = vmatmul.mubr.f32.gmra.mrb[0].mxu0 %v318
        %v389 = vpop.f32.mrb[0].mxu0
        %v390 = vadd.f32 0.0, %v389
        %v391 = vpop.f32.mrb[0].mxu0
        %392 = vmatprep.mubr.f32.mxu0 0.0
        %393 = vmatmul.mubr.f32.gmra.mrb[0].mxu0 %v321
        %v394 = vpop.f32.mrb[0].mxu0
        %v395 = vadd.f32 0.0, %v394
        %v396 = vpop.f32.mrb[0].mxu0
        %397 = vdwg.mxu0
        %v399 = vsel %vm293, %v296, 0
        %v402 = vsel %vm293, %v297, 0
        %404 = vmatprep.subr.mxu0 0.0
        %405 = vmatpush1.msra.mxu0 %v298
        %406 = vmatprep.subr.mxu0 0.0
        %407 = vmatpush1.msra.mxu0 %v299
        %408 = vmatprep.subr.mxu0 0.0
        %409 = vmatpush1.msra.mxu0 %v300
        %410 = vmatprep.subr.mxu0 0.0
        %411 = vmatpush1.msra.mxu0 %v301
        %412 = vmatprep.subr.mxu0 0.0
        %413 = vmatpush1.msra.mxu0 %v302
        %414 = vmatprep.subr.mxu0 0.0
        %415 = vmatpush1.msra.mxu0 %v303
        %416 = vmatprep.subr.mxu0 0.0
        %417 = vmatpush1.msra.mxu0 %v304
        %418 = vmatprep.subr.mxu0 0.0
        %419 = vmatpush1.msra.mxu0 %v305
        %420 = vmatprep.subr.mxu0 0.0
        %421 = vmatpush1.msra.mxu0 0.0
        %422 = vmatprep.subr.mxu0 0.0
        %423 = vmatpush1.msra.mxu0 0.0
        %424 = vmatprep.subr.mxu0 0.0
        %425 = vmatpush1.msra.mxu0 0.0
        %426 = vmatprep.subr.mxu0 0.0
        %427 = vmatpush1.msra.mxu0 0.0
        %428 = vmatprep.subr.mxu0 0.0
        %429 = vmatpush1.msra.mxu0 0.0
        %430 = vmatprep.subr.mxu0 0.0
        %431 = vmatpush1.msra.mxu0 0.0
        %432 = vmatprep.subr.mxu0 0.0
        %433 = vmatpush1.msra.mxu0 0.0
        %434 = vmatprep.subr.mxu0 0.0
        %435 = vmatpush1.msra.mxu0 0.0
        %436 = vmatprep.subr.mxu0 0.0
        %437 = vmatpush1.msra.mxu0 0.0
        %438 = vmatprep.subr.mxu0 0.0
        %439 = vmatpush1.msra.mxu0 0.0
        %440 = vmatprep.subr.mxu0 0.0
        %441 = vmatpush1.msra.mxu0 0.0
        %442 = vmatprep.subr.mxu0 0.0
        %443 = vmatpush1.msra.mxu0 0.0
        %444 = vmatprep.subr.mxu0 0.0
        %445 = vmatpush1.msra.mxu0 0.0
        %446 = vmatprep.subr.mxu0 0.0
        %447 = vmatpush1.msra.mxu0 0.0
        %448 = vmatprep.subr.mxu0 0.0
        %449 = vmatpush1.msra.mxu0 0.0
        %450 = vmatprep.subr.mxu0 0.0
        %451 = vmatpush1.msra.mxu0 0.0
        %452 = vmatprep.subr.mxu0 0.0
        %453 = vmatpush1.msra.mxu0 0.0
        %454 = vmatprep.subr.mxu0 0.0
        %455 = vmatpush1.msra.mxu0 0.0
        %456 = vmatprep.subr.mxu0 0.0
        %457 = vmatpush1.msra.mxu0 0.0
        %458 = vmatprep.subr.mxu0 0.0
        %459 = vmatpush1.msra.mxu0 0.0
        %460 = vmatprep.subr.mxu0 0.0
        %461 = vmatpush1.msra.mxu0 0.0
        %462 = vmatprep.subr.mxu0 0.0
        %463 = vmatpush1.msra.mxu0 0.0
        %464 = vmatprep.subr.mxu0 0.0
        %465 = vmatpush1.msra.mxu0 0.0
        %466 = vmatprep.subr.mxu0 0.0
        %467 = vmatpush1.msra.mxu0 0.0
        %468 = vmatprep.mubr.f32.mxu0 0.0
        %469 = vmatmul.mubr.f32.gmra.mrb[0].mxu0 %v399
        %v470 = vpop.f32.mrb[0].mxu0
        %v471 = vadd.f32 %v390, %v470
        %v472 = vpop.f32.mrb[0].mxu0
        %473 = vmatprep.mubr.f32.mxu0 0.0
        %474 = vmatmul.mubr.f32.gmra.mrb[0].mxu0 %v402
        %v475 = vpop.f32.mrb[0].mxu0
        %v476 = vadd.f32 %v395, %v475
        %v477 = vpop.f32.mrb[0].mxu0
        %478 = vdwg.mxu0
        %v479 = vld [vmem:[#allocation2 + $0x2] sm:$0xff]
        %v480 = vld [vmem:[#allocation2 + $0xa] sm:$0xff]
        %s481 = scalar_lea.vmem [#allocation7], 128
        %v482 = vld [vmem:[%s481] sm:$0xff]
        %v483 = vld [vmem:[%s481 + $0x8] sm:$0xff]
        %v484 = vld [vmem:[%s481 + $0x10] sm:$0xff]
        %v485 = vld [vmem:[%s481 + $0x18] sm:$0xff]
        %v486 = vld [vmem:[%s481 + $0x20] sm:$0xff]
        %v487 = vld [vmem:[%s481 + $0x28] sm:$0xff]
        %v488 = vld [vmem:[%s481 + $0x30] sm:$0xff]
        %v489 = vld [vmem:[%s481 + $0x38] sm:$0xff]
        %v491 = vsel %vm293, %v479, 0
        %v494 = vsel %vm293, %v480, 0
        %496 = vmatprep.subr.mxu0 0.0
        %497 = vmatpush1.msra.mxu0 %v482
        %498 = vmatprep.subr.mxu0 0.0
        %499 = vmatpush1.msra.mxu0 %v483
        %500 = vmatprep.subr.mxu0 0.0
        %501 = vmatpush1.msra.mxu0 %v484
        %502 = vmatprep.subr.mxu0 0.0
        %503 = vmatpush1.msra.mxu0 %v485
        %504 = vmatprep.subr.mxu0 0.0
        %505 = vmatpush1.msra.mxu0 %v486
        %506 = vmatprep.subr.mxu0 0.0
        %507 = vmatpush1.msra.mxu0 %v487
        %508 = vmatprep.subr.mxu0 0.0
        %509 = vmatpush1.msra.mxu0 %v488
        %510 = vmatprep.subr.mxu0 0.0
        %511 = vmatpush1.msra.mxu0 %v489
        %512 = vmatprep.subr.mxu0 0.0
        %513 = vmatpush1.msra.mxu0 0.0
        %514 = vmatprep.subr.mxu0 0.0
        %515 = vmatpush1.msra.mxu0 0.0
        %516 = vmatprep.subr.mxu0 0.0
        %517 = vmatpush1.msra.mxu0 0.0
        %518 = vmatprep.subr.mxu0 0.0
        %519 = vmatpush1.msra.mxu0 0.0
        %520 = vmatprep.subr.mxu0 0.0
        %521 = vmatpush1.msra.mxu0 0.0
        %522 = vmatprep.subr.mxu0 0.0
        %523 = vmatpush1.msra.mxu0 0.0
        %524 = vmatprep.subr.mxu0 0.0
        %525 = vmatpush1.msra.mxu0 0.0
        %526 = vmatprep.subr.mxu0 0.0
        %527 = vmatpush1.msra.mxu0 0.0
        %528 = vmatprep.subr.mxu0 0.0
        %529 = vmatpush1.msra.mxu0 0.0
        %530 = vmatprep.subr.mxu0 0.0
        %531 = vmatpush1.msra.mxu0 0.0
        %532 = vmatprep.subr.mxu0 0.0
        %533 = vmatpush1.msra.mxu0 0.0
        %534 = vmatprep.subr.mxu0 0.0
        %535 = vmatpush1.msra.mxu0 0.0
        %536 = vmatprep.subr.mxu0 0.0
        %537 = vmatpush1.msra.mxu0 0.0
        %538 = vmatprep.subr.mxu0 0.0
        %539 = vmatpush1.msra.mxu0 0.0
        %540 = vmatprep.subr.mxu0 0.0
        %541 = vmatpush1.msra.mxu0 0.0
        %542 = vmatprep.subr.mxu0 0.0
        %543 = vmatpush1.msra.mxu0 0.0
        %544 = vmatprep.subr.mxu0 0.0
        %545 = vmatpush1.msra.mxu0 0.0
        %546 = vmatprep.subr.mxu0 0.0
        %547 = vmatpush1.msra.mxu0 0.0
        %548 = vmatprep.subr.mxu0 0.0
        %549 = vmatpush1.msra.mxu0 0.0
        %550 = vmatprep.subr.mxu0 0.0
        %551 = vmatpush1.msra.mxu0 0.0
        %552 = vmatprep.subr.mxu0 0.0
        %553 = vmatpush1.msra.mxu0 0.0
        %554 = vmatprep.subr.mxu0 0.0
        %555 = vmatpush1.msra.mxu0 0.0
        %556 = vmatprep.subr.mxu0 0.0
        %557 = vmatpush1.msra.mxu0 0.0
        %558 = vmatprep.subr.mxu0 0.0
        %559 = vmatpush1.msra.mxu0 0.0
        %560 = vmatprep.mubr.f32.mxu0 0.0
        %561 = vmatmul.mubr.f32.gmra.mrb[0].mxu0 %v491
        %v562 = vpop.f32.mrb[0].mxu0
        %v563 = vadd.f32 0.0, %v562
        %v564 = vpop.f32.mrb[0].mxu0
        %565 = vmatprep.mubr.f32.mxu0 0.0
        %566 = vmatmul.mubr.f32.gmra.mrb[0].mxu0 %v494
        %v567 = vpop.f32.mrb[0].mxu0
        %v568 = vadd.f32 0.0, %v567
        %v569 = vpop.f32.mrb[0].mxu0
        %570 = vdwg.mxu0
        %v571 = vadd.f32 %v471, %v563
        %v572 = vadd.f32 %v476, %v568
        %v573 = vld [vmem:[%s2 + $0x2] sm:$0x1]
        %v574 = vlaneseq
        %v575 = vshrl.u32 %v574, 7
        %v576 = vsub.s32 0, %v575
        %v577 = vrot.slane %v573, %v576
        %v578 = vadd.f32 %v571, %v577
        %v579 = vadd.f32 %v572, %v577
        %v580 = vld [vmem:[%s4] sm:$0x1]
        %v581 = vlaneseq
        %v582 = vshrl.u32 %v581, 7
        %v583 = vsub.s32 0, %v582
        %v584 = vrot.slane %v580, %v583
        %v585 = vmul.f32 %v578, %v584
        %v586 = vmul.f32 %v579, %v584
        %v587 = vld [vmem:[%s4 + $0x1] sm:$0x1]
        %v588 = vlaneseq
        %v589 = vshrl.u32 %v588, 7
        %v590 = vsub.s32 0, %v589
        %v591 = vrot.slane %v587, %v590
        %v592 = vadd.f32 %v585, %v591
        %v593 = vadd.f32 %v586, %v591
        %v594 = vmax.f32 %v592, 0.0
        %v595 = vmax.f32 %v593, 0.0
        %596 = vst [vmem:[#allocation3] sm:$0x1] 0.0
        %597 = vst [vmem:[#allocation3 + $0x11] sm:$0x1] 0.0
        %598 = vst [vmem:[#allocation3 + $0x1] sm:$0xff] %v594
        %599 = vst [vmem:[#allocation3 + $0x9] sm:$0xff] %v595
        %v600 = vld [vmem:[#allocation3] sm:$0xff]
        %v601 = vld [vmem:[#allocation3 + $0x8] sm:$0xff]
        %v602 = vld [vmem:[#allocation9] sm:$0xff]
        %v603 = vld [vmem:[#allocation9 + $0x8] sm:$0xff]
        %v604 = vld [vmem:[#allocation9 + $0x10] sm:$0xff]
        %v605 = vld [vmem:[#allocation9 + $0x18] sm:$0xff]
        %v606 = vld [vmem:[#allocation9 + $0x20] sm:$0xff]
        %v607 = vld [vmem:[#allocation9 + $0x28] sm:$0xff]
        %v608 = vld [vmem:[#allocation9 + $0x30] sm:$0xff]
        %v609 = vld [vmem:[#allocation9 + $0x38] sm:$0xff]
        %v610 = vld [vmem:[#allocation9 + $0x40] sm:$0xff]
        %v611 = vld [vmem:[#allocation9 + $0x48] sm:$0xff]
        %v612 = vld [vmem:[#allocation9 + $0x50] sm:$0xff]
        %v613 = vld [vmem:[#allocation9 + $0x58] sm:$0xff]
        %v614 = vld [vmem:[#allocation9 + $0x60] sm:$0xff]
        %v615 = vld [vmem:[#allocation9 + $0x68] sm:$0xff]
        %v616 = vld [vmem:[#allocation9 + $0x70] sm:$0xff]
        %v617 = vld [vmem:[#allocation9 + $0x78] sm:$0xff]
        %v618 = vld [vmem:[#allocation3 + $0x1] sm:$0xff]
        %v619 = vld [vmem:[#allocation3 + $0x9] sm:$0xff]
        %s620 = scalar_lea.vmem [#allocation9], 128
        %v621 = vld [vmem:[%s620] sm:$0xff]
        %v622 = vld [vmem:[%s620 + $0x8] sm:$0xff]
        %v623 = vld [vmem:[%s620 + $0x10] sm:$0xff]
        %v624 = vld [vmem:[%s620 + $0x18] sm:$0xff]
        %v625 = vld [vmem:[%s620 + $0x20] sm:$0xff]
        %v626 = vld [vmem:[%s620 + $0x28] sm:$0xff]
        %v627 = vld [vmem:[%s620 + $0x30] sm:$0xff]
        %v628 = vld [vmem:[%s620 + $0x38] sm:$0xff]
        %v629 = vld [vmem:[%s620 + $0x40] sm:$0xff]
        %v630 = vld [vmem:[%s620 + $0x48] sm:$0xff]
        %v631 = vld [vmem:[%s620 + $0x50] sm:$0xff]
        %v632 = vld [vmem:[%s620 + $0x58] sm:$0xff]
        %v633 = vld [vmem:[%s620 + $0x60] sm:$0xff]
        %v634 = vld [vmem:[%s620 + $0x68] sm:$0xff]
        %v635 = vld [vmem:[%s620 + $0x70] sm:$0xff]
        %v636 = vld [vmem:[%s620 + $0x78] sm:$0xff]
        %637 = vmatprep.subr.mxu0 0.0
        %638 = vmatpush1.msra.mxu0 %v621
        %639 = vmatprep.subr.mxu0 0.0
        %640 = vmatpush1.msra.mxu0 %v622
        %641 = vmatprep.subr.mxu0 0.0
        %642 = vmatpush1.msra.mxu0 %v623
        %643 = vmatprep.subr.mxu0 0.0
        %644 = vmatpush1.msra.mxu0 %v624
        %645 = vmatprep.subr.mxu0 0.0
        %646 = vmatpush1.msra.mxu0 %v625
        %647 = vmatprep.subr.mxu0 0.0
        %648 = vmatpush1.msra.mxu0 %v626
        %649 = vmatprep.subr.mxu0 0.0
        %650 = vmatpush1.msra.mxu0 %v627
        %651 = vmatprep.subr.mxu0 0.0
        %652 = vmatpush1.msra.mxu0 %v628
        %653 = vmatprep.subr.mxu0 0.0
        %654 = vmatpush1.msra.mxu0 %v629
        %655 = vmatprep.subr.mxu0 0.0
        %656 = vmatpush1.msra.mxu0 %v630
        %657 = vmatprep.subr.mxu0 0.0
        %658 = vmatpush1.msra.mxu0 %v631
        %659 = vmatprep.subr.mxu0 0.0
        %660 = vmatpush1.msra.mxu0 %v632
        %661 = vmatprep.subr.mxu0 0.0
        %662 = vmatpush1.msra.mxu0 %v633
        %663 = vmatprep.subr.mxu0 0.0
        %664 = vmatpush1.msra.mxu0 %v634
        %665 = vmatprep.subr.mxu0 0.0
        %666 = vmatpush1.msra.mxu0 %v635
        %667 = vmatprep.subr.mxu0 0.0
        %668 = vmatpush1.msra.mxu0 %v636
        %669 = vmatprep.subr.mxu0 0.0
        %670 = vmatpush1.msra.mxu0 0.0
        %671 = vmatprep.subr.mxu0 0.0
        %672 = vmatpush1.msra.mxu0 0.0
        %673 = vmatprep.subr.mxu0 0.0
        %674 = vmatpush1.msra.mxu0 0.0
        %675 = vmatprep.subr.mxu0 0.0
        %676 = vmatpush1.msra.mxu0 0.0
        %677 = vmatprep.subr.mxu0 0.0
        %678 = vmatpush1.msra.mxu0 0.0
        %679 = vmatprep.subr.mxu0 0.0
        %680 = vmatpush1.msra.mxu0 0.0
        %681 = vmatprep.subr.mxu0 0.0
        %682 = vmatpush1.msra.mxu0 0.0
        %683 = vmatprep.subr.mxu0 0.0
        %684 = vmatpush1.msra.mxu0 0.0
        %685 = vmatprep.subr.mxu0 0.0
        %686 = vmatpush1.msra.mxu0 0.0
        %687 = vmatprep.subr.mxu0 0.0
        %688 = vmatpush1.msra.mxu0 0.0
        %689 = vmatprep.subr.mxu0 0.0
        %690 = vmatpush1.msra.mxu0 0.0
        %691 = vmatprep.subr.mxu0 0.0
        %692 = vmatpush1.msra.mxu0 0.0
        %693 = vmatprep.subr.mxu0 0.0
        %694 = vmatpush1.msra.mxu0 0.0
        %695 = vmatprep.subr.mxu0 0.0
        %696 = vmatpush1.msra.mxu0 0.0
        %697 = vmatprep.subr.mxu0 0.0
        %698 = vmatpush1.msra.mxu0 0.0
        %699 = vmatprep.subr.mxu0 0.0
        %700 = vmatpush1.msra.mxu0 0.0
        %701 = vmatprep.mubr.f32.mxu0 0.0
        %702 = vmatmul.mubr.f32.gmra.mrb[0].mxu0 %v618
        %v703 = vpop.f32.mrb[0].mxu0
        %v704 = vadd.f32 0.0, %v703
        %v705 = vpop.f32.mrb[0].mxu0
        %706 = vmatprep.mubr.f32.mxu0 0.0
        %707 = vmatmul.mubr.f32.gmra.mrb[0].mxu0 %v619
        %v708 = vpop.f32.mrb[0].mxu0
        %v709 = vadd.f32 0.0, %v708
        %v710 = vpop.f32.mrb[0].mxu0
        %711 = vdwg.mxu0
        %712 = vmatprep.subr.mxu0 0.0
        %713 = vmatpush1.msra.mxu0 %v602
        %714 = vmatprep.subr.mxu0 0.0
        %715 = vmatpush1.msra.mxu0 %v603
        %716 = vmatprep.subr.mxu0 0.0
        %717 = vmatpush1.msra.mxu0 %v604
        %718 = vmatprep.subr.mxu0 0.0
        %719 = vmatpush1.msra.mxu0 %v605
        %720 = vmatprep.subr.mxu0 0.0
        %721 = vmatpush1.msra.mxu0 %v606
        %722 = vmatprep.subr.mxu0 0.0
        %723 = vmatpush1.msra.mxu0 %v607
        %724 = vmatprep.subr.mxu0 0.0
        %725 = vmatpush1.msra.mxu0 %v608
        %726 = vmatprep.subr.mxu0 0.0
        %727 = vmatpush1.msra.mxu0 %v609
        %728 = vmatprep.subr.mxu0 0.0
        %729 = vmatpush1.msra.mxu0 %v610
        %730 = vmatprep.subr.mxu0 0.0
        %731 = vmatpush1.msra.mxu0 %v611
        %732 = vmatprep.subr.mxu0 0.0
        %733 = vmatpush1.msra.mxu0 %v612
        %734 = vmatprep.subr.mxu0 0.0
        %735 = vmatpush1.msra.mxu0 %v613
        %736 = vmatprep.subr.mxu0 0.0
        %737 = vmatpush1.msra.mxu0 %v614
        %738 = vmatprep.subr.mxu0 0.0
        %739 = vmatpush1.msra.mxu0 %v615
        %740 = vmatprep.subr.mxu0 0.0
        %741 = vmatpush1.msra.mxu0 %v616
        %742 = vmatprep.subr.mxu0 0.0
        %743 = vmatpush1.msra.mxu0 %v617
        %744 = vmatprep.subr.mxu0 0.0
        %745 = vmatpush1.msra.mxu0 0.0
        %746 = vmatprep.subr.mxu0 0.0
        %747 = vmatpush1.msra.mxu0 0.0
        %748 = vmatprep.subr.mxu0 0.0
        %749 = vmatpush1.msra.mxu0 0.0
        %750 = vmatprep.subr.mxu0 0.0
        %751 = vmatpush1.msra.mxu0 0.0
        %752 = vmatprep.subr.mxu0 0.0
        %753 = vmatpush1.msra.mxu0 0.0
        %754 = vmatprep.subr.mxu0 0.0
        %755 = vmatpush1.msra.mxu0 0.0
        %756 = vmatprep.subr.mxu0 0.0
        %757 = vmatpush1.msra.mxu0 0.0
        %758 = vmatprep.subr.mxu0 0.0
        %759 = vmatpush1.msra.mxu0 0.0
        %760 = vmatprep.subr.mxu0 0.0
        %761 = vmatpush1.msra.mxu0 0.0
        %762 = vmatprep.subr.mxu0 0.0
        %763 = vmatpush1.msra.mxu0 0.0
        %764 = vmatprep.subr.mxu0 0.0
        %765 = vmatpush1.msra.mxu0 0.0
        %766 = vmatprep.subr.mxu0 0.0
        %767 = vmatpush1.msra.mxu0 0.0
        %768 = vmatprep.subr.mxu0 0.0
        %769 = vmatpush1.msra.mxu0 0.0
        %770 = vmatprep.subr.mxu0 0.0
        %771 = vmatpush1.msra.mxu0 0.0
        %772 = vmatprep.subr.mxu0 0.0
        %773 = vmatpush1.msra.mxu0 0.0
        %774 = vmatprep.subr.mxu0 0.0
        %775 = vmatpush1.msra.mxu0 0.0
        %776 = vmatprep.mubr.f32.mxu0 0.0
        %777 = vmatmul.mubr.f32.gmra.mrb[0].mxu0 %v600
        %v778 = vpop.f32.mrb[0].mxu0
        %v779 = vadd.f32 %v704, %v778
        %v780 = vpop.f32.mrb[0].mxu0
        %781 = vmatprep.mubr.f32.mxu0 0.0
        %782 = vmatmul.mubr.f32.gmra.mrb[0].mxu0 %v601
        %v783 = vpop.f32.mrb[0].mxu0
        %v784 = vadd.f32 %v709, %v783
        %v785 = vpop.f32.mrb[0].mxu0
        %786 = vdwg.mxu0
        %v787 = vld [vmem:[#allocation3 + $0x2] sm:$0xff]
        %v788 = vld [vmem:[#allocation3 + $0xa] sm:$0xff]
        %s789 = scalar_lea.vmem [#allocation9], 256
        %v790 = vld [vmem:[%s789] sm:$0xff]
        %v791 = vld [vmem:[%s789 + $0x8] sm:$0xff]
        %v792 = vld [vmem:[%s789 + $0x10] sm:$0xff]
        %v793 = vld [vmem:[%s789 + $0x18] sm:$0xff]
        %v794 = vld [vmem:[%s789 + $0x20] sm:$0xff]
        %v795 = vld [vmem:[%s789 + $0x28] sm:$0xff]
        %v796 = vld [vmem:[%s789 + $0x30] sm:$0xff]
        %v797 = vld [vmem:[%s789 + $0x38] sm:$0xff]
        %v798 = vld [vmem:[%s789 + $0x40] sm:$0xff]
        %v799 = vld [vmem:[%s789 + $0x48] sm:$0xff]
        %v800 = vld [vmem:[%s789 + $0x50] sm:$0xff]
        %v801 = vld [vmem:[%s789 + $0x58] sm:$0xff]
        %v802 = vld [vmem:[%s789 + $0x60] sm:$0xff]
        %v803 = vld [vmem:[%s789 + $0x68] sm:$0xff]
        %v804 = vld [vmem:[%s789 + $0x70] sm:$0xff]
        %v805 = vld [vmem:[%s789 + $0x78] sm:$0xff]
        %806 = vmatprep.subr.mxu0 0.0
        %807 = vmatpush1.msra.mxu0 %v790
        %808 = vmatprep.subr.mxu0 0.0
        %809 = vmatpush1.msra.mxu0 %v791
        %810 = vmatprep.subr.mxu0 0.0
        %811 = vmatpush1.msra.mxu0 %v792
        %812 = vmatprep.subr.mxu0 0.0
        %813 = vmatpush1.msra.mxu0 %v793
        %814 = vmatprep.subr.mxu0 0.0
        %815 = vmatpush1.msra.mxu0 %v794
        %816 = vmatprep.subr.mxu0 0.0
        %817 = vmatpush1.msra.mxu0 %v795
        %818 = vmatprep.subr.mxu0 0.0
        %819 = vmatpush1.msra.mxu0 %v796
        %820 = vmatprep.subr.mxu0 0.0
        %821 = vmatpush1.msra.mxu0 %v797
        %822 = vmatprep.subr.mxu0 0.0
        %823 = vmatpush1.msra.mxu0 %v798
        %824 = vmatprep.subr.mxu0 0.0
        %825 = vmatpush1.msra.mxu0 %v799
        %826 = vmatprep.subr.mxu0 0.0
        %827 = vmatpush1.msra.mxu0 %v800
        %828 = vmatprep.subr.mxu0 0.0
        %829 = vmatpush1.msra.mxu0 %v801
        %830 = vmatprep.subr.mxu0 0.0
        %831 = vmatpush1.msra.mxu0 %v802
        %832 = vmatprep.subr.mxu0 0.0
        %833 = vmatpush1.msra.mxu0 %v803
        %834 = vmatprep.subr.mxu0 0.0
        %835 = vmatpush1.msra.mxu0 %v804
        %836 = vmatprep.subr.mxu0 0.0
        %837 = vmatpush1.msra.mxu0 %v805
        %838 = vmatprep.subr.mxu0 0.0
        %839 = vmatpush1.msra.mxu0 0.0
        %840 = vmatprep.subr.mxu0 0.0
        %841 = vmatpush1.msra.mxu0 0.0
        %842 = vmatprep.subr.mxu0 0.0
        %843 = vmatpush1.msra.mxu0 0.0
        %844 = vmatprep.subr.mxu0 0.0
        %845 = vmatpush1.msra.mxu0 0.0
        %846 = vmatprep.subr.mxu0 0.0
        %847 = vmatpush1.msra.mxu0 0.0
        %848 = vmatprep.subr.mxu0 0.0
        %849 = vmatpush1.msra.mxu0 0.0
        %850 = vmatprep.subr.mxu0 0.0
        %851 = vmatpush1.msra.mxu0 0.0
        %852 = vmatprep.subr.mxu0 0.0
        %853 = vmatpush1.msra.mxu0 0.0
        %854 = vmatprep.subr.mxu0 0.0
        %855 = vmatpush1.msra.mxu0 0.0
        %856 = vmatprep.subr.mxu0 0.0
        %857 = vmatpush1.msra.mxu0 0.0
        %858 = vmatprep.subr.mxu0 0.0
        %859 = vmatpush1.msra.mxu0 0.0
        %860 = vmatprep.subr.mxu0 0.0
        %861 = vmatpush1.msra.mxu0 0.0
        %862 = vmatprep.subr.mxu0 0.0
        %863 = vmatpush1.msra.mxu0 0.0
        %864 = vmatprep.subr.mxu0 0.0
        %865 = vmatpush1.msra.mxu0 0.0
        %866 = vmatprep.subr.mxu0 0.0
        %867 = vmatpush1.msra.mxu0 0.0
        %868 = vmatprep.subr.mxu0 0.0
        %869 = vmatpush1.msra.mxu0 0.0
        %870 = vmatprep.mubr.f32.mxu0 0.0
        %871 = vmatmul.mubr.f32.gmra.mrb[0].mxu0 %v787
        %v872 = vpop.f32.mrb[0].mxu0
        %v873 = vadd.f32 0.0, %v872
        %v874 = vpop.f32.mrb[0].mxu0
        %875 = vmatprep.mubr.f32.mxu0 0.0
        %876 = vmatmul.mubr.f32.gmra.mrb[0].mxu0 %v788
        %v877 = vpop.f32.mrb[0].mxu0
        %v878 = vadd.f32 0.0, %v877
        %v879 = vpop.f32.mrb[0].mxu0
        %880 = vdwg.mxu0
        %v881 = vadd.f32 %v779, %v873
        %v882 = vadd.f32 %v784, %v878
        %v883 = vld [vmem:[%s4 + $0x2] sm:$0x1]
        %v884 = vlaneseq
        %v885 = vshrl.u32 %v884, 7
        %v886 = vsub.s32 0, %v885
        %v887 = vrot.slane %v883, %v886
        %v888 = vadd.f32 %v881, %v887
        %v889 = vadd.f32 %v882, %v887
        %890 = vst [vmem:[%s271] sm:$0xff] %v888
        %891 = vst [vmem:[%s271 + $0x8] sm:$0xff] %v889
        %s892 = sand.u32 %s141, 1
        %s893 = scalar_lea.sflag [#allocation6], %s892
        %s894 = sand.u32 %s141, 1
        %s895 = smul.addr %s894, 16
        %s896 = scalar_lea.vmem [#allocation10], %s895
        // Predicated region
        $region53: #{tpu_custom_call.1} parent=39 // pred_check
          %p897 = pneg %p151
        $region54: #{tpu_custom_call.1} parent=39 // pred_check_branch
          %899 = sbr.rel (%p897) target = $region56
        $region55: #{tpu_custom_call.1} parent=39 // pred_region
          %s901 = ssub.s32 256, 256
          %902 = vsyncadd %s893, %s901
          %s903 = smul.addr %s23, 2
          %s904 = smul.addr %s903, 128
          %s905 = scalar_lea.hbm %s5, %s904
          %s906 = sshll.u32 %s896, 4
          %s907 = int_to_ptr.vmem [resolvable:$true] %s906
          %912 = dma.vmem_to_hbm [thread:$0]  %s907, 256, %s905, %s893, 128, 128, 8
        $region56: #{tpu_custom_call.1} parent=39 // pred_fallthru
          _
      $region40: #{tpu_custom_call.1} parent=5 // pred_fallthru
        _
      %p913 = scmp.le.s32.totalorder 2, %s18
      // Predicated region
      $region57: #{tpu_custom_call.1} parent=5 // pred_check
        %p914 = pneg %p913
      $region58: #{tpu_custom_call.1} parent=5 // pred_check_branch
        %916 = sbr.rel (%p914) target = $region60
      $region59: #{tpu_custom_call.1} parent=5 // pred_region
        %s917 = ssub.s32 %s18, 2
        // Predicated region
        $region61: #{tpu_custom_call.1} parent=59 // pred_check
          %p918 = pneg %p157
        $region62: #{tpu_custom_call.1} parent=59 // pred_check_branch
          %920 = sbr.rel (%p918) target = $region64
        $region63: #{tpu_custom_call.1} parent=59 // pred_region
          %s921 = sand.u32 %s142, 1
          %s922 = scalar_lea.sflag [#allocation6], %s921
          %s923 = sand.u32 %s142, 1
          %s924 = smul.addr %s923, 16
          %s925 = scalar_lea.vmem [#allocation10], %s924
          %926 = dma.done %s922, 256
        $region64: #{tpu_custom_call.1} parent=59 // pred_fallthru
          _
      $region60: #{tpu_custom_call.1} parent=5 // pred_fallthru
        _
    $region6: #{tpu_custom_call.1} parent=1 // loop_footer
      %s22 = sadd.s32 1, %s18
    $region7: #{tpu_custom_call.1} parent=1 // loop_footer_branch
      %17 = sbr.rel target = $region3
    $region8: #{tpu_custom_call.1} parent=1 // loop_exit
      _
    %927 = vsyncpa [#allocation5], 1
    %s928 = scalar_lea.sflag [#allocation5], 1
    %929 = vsyncpa %s928, 1
    %930 = vsyncpa [#allocation8], 1
    %931 = vsyncpa [#allocation6], 1
    %s932 = scalar_lea.sflag [#allocation6], 1
    %933 = vsyncpa %s932, 1

</llo_original>
